<compile_context>
chip_gen: v6e
topology: v6e:2x2x1
jax: 0.10.0
libtpu: 0.0.40
codegen_flags: <defaults>
</compile_context>

<pallas_src>
import functools

import numpy as np
import jax
import jax.numpy as jnp
from jax import lax
from jax.experimental import pallas as pl
from jax.experimental.pallas import tpu as pltpu


def _yolo_kernel(g_ref, p_ref, io_ref, *, stride, anchors):
    """One batch image per grid step.

    g_ref:  (no, S) f32  pre-scaled grid offsets (row0 = gx*stride, row1 = gy*stride,
                         other rows zero).
    p_ref:  (1, na, no, S) raw network outputs for this image.
    io_ref: (1, na, no, S) decoded boxes / scores (channel-major).
    """
    x = p_ref[0]                                   # (na, no, S) float32
    na, no, S = x.shape
    f32 = x.dtype

    # Per-element anchor / channel ids (cheap VPU iota + compares, no div/mod).
    a_id = lax.broadcasted_iota(jnp.int32, (na, no, S), 0)
    c_id = lax.broadcasted_iota(jnp.int32, (na, no, S), 1)
    is_wh = (c_id >= 2) & (c_id < 4)

    # Multiplicative term: stride for xy channels, anchor w/h for wh channels,
    # 1 for obj/cls.  Anchors are trace-time Python floats (baked constants).
    mul = jnp.where(c_id < 2, jnp.float32(stride), jnp.float32(1.0))
    for ai, (aw, ah) in enumerate(anchors):
        mul = jnp.where((a_id == ai) & (c_id == 2), jnp.float32(aw), mul)
        mul = jnp.where((a_id == ai) & (c_id == 3), jnp.float32(ah), mul)

    # xy:      sigmoid(t)*stride + grid*stride
    # wh:      exp(t)*anchor                  (stride folded away)
    # obj/cls: sigmoid(t)
    # exp() on non-wh channels is discarded by the select (EUP slack); g is zero
    # on non-xy channels, so one fused select * mul + add covers every channel.
    out = jnp.where(is_wh, jnp.exp(x), jax.nn.sigmoid(x)) * mul + g_ref[...]
    io_ref[0] = out.astype(io_ref.dtype)           # single bulk, lane-dense store


def yolo_forward(p, anchors, img_size, *, no=6, training=False):
    """Replicates YOLOLayer.forward.

    p: (bs, na*no, ny, nx) float32.
    anchors: (na, 2) array-like of *fixed* module parameters (baked at trace time).
    img_size: tuple of ints (max(img_size) is used, as in the PyTorch code).
    Returns p_perm if training, else (io.view(bs, -1, no), p_perm).
    """
    bs, ch, ny, nx = p.shape
    anc_np = np.asarray(anchors, dtype=np.float32)           # fixed parameters
    na = int(anc_np.shape[0])
    assert ch == na * no, (ch, na, no)
    anchors_t = tuple((float(w), float(h)) for w, h in anc_np)

    # Module output layout: (bs, na, ny, nx, no).
    p_out = jnp.transpose(p.reshape(bs, na, no, ny, nx), (0, 1, 3, 4, 2))
    if training:
        return p_out

    stride = float(max(img_size)) / float(max(nx, ny))
    S = ny * nx                                               # lane axis (256 here)

    # Lane-dense view of the raw predictions (free, contiguous reshape).
    p4 = p.reshape(bs, na, no, S)

    # Pre-scaled grid offsets (equivalent of the module's grid_xy buffer):
    # row 0 -> gx*stride, row 1 -> gy*stride, remaining channels 0.
    yv, xv = jnp.meshgrid(jnp.arange(ny), jnp.arange(nx), indexing="ij")
    gx = (xv.reshape(-1).astype(p.dtype)) * stride
    gy = (yv.reshape(-1).astype(p.dtype)) * stride
    g = jnp.zeros((no, S), p.dtype).at[0].set(gx).at[1].set(gy)

    kernel = functools.partial(_yolo_kernel, stride=stride, anchors=anchors_t)

    io4 = pl.pallas_call(
        kernel,
        out_shape=jax.ShapeDtypeStruct((bs, na, no, S), p.dtype),
        grid_spec=pltpu.PrefetchScalarGridSpec(
            num_scalar_prefetch=0,
            grid=(bs,),
            in_specs=[
                # Constant block index -> DMA'd once, reused every step.
                pl.BlockSpec((no, S), lambda b: (0, 0)),
                pl.BlockSpec((1, na, no, S), lambda b: (b, 0, 0, 0)),
            ],
            out_specs=pl.BlockSpec((1, na, no, S), lambda b: (b, 0, 0, 0)),
        ),
        compiler_params=pltpu.CompilerParams(
            dimension_semantics=("parallel",)),
    )(g, p4)

    # Layout glue required by the module's output contract:
    # (bs, na, no, ny, nx) -> (bs, na, ny, nx, no) -> (bs, na*ny*nx, no).
    io = jnp.transpose(io4.reshape(bs, na, no, ny, nx), (0, 1, 3, 4, 2)).reshape(bs, -1, no)
    return io, p_out


def yolo_ref(p, anchors, img_size, no=6):
    """Pure-JAX reference mirroring the PyTorch eval-mode forward."""
    bs, ch, ny, nx = p.shape
    na = anchors.shape[0]
    stride = float(max(img_size)) / float(max(nx, ny))
    pp = jnp.transpose(p.reshape(bs, na, no, ny, nx), (0, 1, 3, 4, 2))
    yv, xv = jnp.meshgrid(jnp.arange(ny), jnp.arange(nx), indexing="ij")
    grid_xy = jnp.stack((xv, yv), 2).astype(p.dtype).reshape(1, 1, ny, nx, 2)
    anchor_wh = (anchors / stride).reshape(1, na, 1, 1, 2).astype(p.dtype)
    xy = (jax.nn.sigmoid(pp[..., :2]) + grid_xy) * stride
    wh = (jnp.exp(pp[..., 2:4]) * anchor_wh) * stride
    rest = jax.nn.sigmoid(pp[..., 4:])
    io = jnp.concatenate([xy, wh, rest], axis=-1)
    return io.reshape(bs, -1, no), pp


if __name__ == "__main__":
    key = jax.random.PRNGKey(0)

    # Fixed module "parameters": 3 anchors (the __init__ argument of YOLOLayer).
    anchors = [[10.0, 13.0], [16.0, 30.0], [33.0, 23.0]]
    na, no = len(anchors), 6

    bs, ny, nx = 2, 16, 16
    img_size = (128, 128)                           # stride = 128 / 16 = 8
    p = jax.random.normal(key, (bs, na * no, ny, nx), dtype=jnp.float32)

    io, p_out = yolo_forward(p, anchors, img_size, no=no, training=False)
    jax.block_until_ready((io, p_out))

    io_r, p_r = yolo_ref(p, jnp.asarray(anchors, jnp.float32), img_size, no=no)
    assert io.shape == (bs, na * ny * nx, no)
    assert p_out.shape == (bs, na, ny, nx, no)
    assert jnp.allclose(io, io_r, atol=1e-4, rtol=1e-5), float(jnp.max(jnp.abs(io - io_r)))
    assert jnp.allclose(p_out, p_r)

    # Training-mode forward is a pure reshape/permute (no kernel needed).
    p_train = yolo_forward(p, anchors, img_size, no=no, training=True)
    assert jnp.allclose(p_train, p_r)

    print("KERNEL_OK")
</pallas_src>

<mosaic_0001>
module attributes {stable_mosaic.version = 11 : i64} {
  func.func @_yolo_kernel(%arg0: i32, %arg1: memref<6x256xf32, #tpu.memory_space<vmem>>, %arg2: memref<1x3x6x256xf32, #tpu.memory_space<vmem>>, %arg3: memref<1x3x6x256xf32, #tpu.memory_space<vmem>>) attributes {dimension_semantics = [#tpu.dimension_semantics<parallel>], iteration_bounds = array<i64: 2>, scalar_prefetch = 0 : i64, scratch_operands = 0 : i64, tpu.core_type = #tpu.core_type<tc>, window_params = [{pipeline_mode = #tpu.pipeline_mode<synchronous>, transform_indices = @transform_0, window_bounds = array<i64: 6, 256>}, {transform_indices = @transform_1, window_bounds = array<i64: 1, 3, 6, 256>}, {transform_indices = @transform_2, window_bounds = array<i64: 1, 3, 6, 256>}]} {
    %c0 = arith.constant 0 : index
    %c0_0 = arith.constant 0 : index
    %c0_1 = arith.constant 0 : index
    %c0_2 = arith.constant 0 : index
    %0 = vector.load %arg2[%c0, %c0_0, %c0_1, %c0_2] : memref<1x3x6x256xf32, #tpu.memory_space<vmem>>, vector<1x3x6x256xf32>
    %1 = vector.shape_cast %0 : vector<1x3x6x256xf32> to vector<3x6x256xf32>
    %2 = tpu.iota {dimensions = array<i32: 0>} : vector<3x6x256xi32>
    %3 = tpu.iota {dimensions = array<i32: 1>} : vector<3x6x256xi32>
    %c2_i32 = arith.constant 2 : i32
    %4 = vector.broadcast %c2_i32 : i32 to vector<3x6x256xi32>
    %5 = arith.cmpi sge, %3, %4 : vector<3x6x256xi32>
    %c4_i32 = arith.constant 4 : i32
    %6 = vector.broadcast %c4_i32 : i32 to vector<3x6x256xi32>
    %7 = arith.cmpi slt, %3, %6 : vector<3x6x256xi32>
    %8 = arith.andi %5, %7 : vector<3x6x256xi1>
    %c2_i32_3 = arith.constant 2 : i32
    %9 = vector.broadcast %c2_i32_3 : i32 to vector<3x6x256xi32>
    %10 = arith.cmpi slt, %3, %9 : vector<3x6x256xi32>
    %cst = arith.constant 8.000000e+00 : f32
    %cst_4 = arith.constant 1.000000e+00 : f32
    %11 = vector.broadcast %cst : f32 to vector<3x6x256xf32>
    %12 = vector.broadcast %cst_4 : f32 to vector<3x6x256xf32>
    %13 = arith.select %10, %11, %12 : vector<3x6x256xi1>, vector<3x6x256xf32>
    %c0_i32 = arith.constant 0 : i32
    %14 = vector.broadcast %c0_i32 : i32 to vector<3x6x256xi32>
    %15 = arith.cmpi eq, %2, %14 : vector<3x6x256xi32>
    %c2_i32_5 = arith.constant 2 : i32
    %16 = vector.broadcast %c2_i32_5 : i32 to vector<3x6x256xi32>
    %17 = arith.cmpi eq, %3, %16 : vector<3x6x256xi32>
    %18 = arith.andi %15, %17 : vector<3x6x256xi1>
    %cst_6 = arith.constant 1.000000e+01 : f32
    %19 = vector.broadcast %cst_6 : f32 to vector<3x6x256xf32>
    %20 = arith.select %18, %19, %13 : vector<3x6x256xi1>, vector<3x6x256xf32>
    %c0_i32_7 = arith.constant 0 : i32
    %21 = vector.broadcast %c0_i32_7 : i32 to vector<3x6x256xi32>
    %22 = arith.cmpi eq, %2, %21 : vector<3x6x256xi32>
    %c3_i32 = arith.constant 3 : i32
    %23 = vector.broadcast %c3_i32 : i32 to vector<3x6x256xi32>
    %24 = arith.cmpi eq, %3, %23 : vector<3x6x256xi32>
    %25 = arith.andi %22, %24 : vector<3x6x256xi1>
    %cst_8 = arith.constant 1.300000e+01 : f32
    %26 = vector.broadcast %cst_8 : f32 to vector<3x6x256xf32>
    %27 = arith.select %25, %26, %20 : vector<3x6x256xi1>, vector<3x6x256xf32>
    %c1_i32 = arith.constant 1 : i32
    %28 = vector.broadcast %c1_i32 : i32 to vector<3x6x256xi32>
    %29 = arith.cmpi eq, %2, %28 : vector<3x6x256xi32>
    %c2_i32_9 = arith.constant 2 : i32
    %30 = vector.broadcast %c2_i32_9 : i32 to vector<3x6x256xi32>
    %31 = arith.cmpi eq, %3, %30 : vector<3x6x256xi32>
    %32 = arith.andi %29, %31 : vector<3x6x256xi1>
    %cst_10 = arith.constant 1.600000e+01 : f32
    %33 = vector.broadcast %cst_10 : f32 to vector<3x6x256xf32>
    %34 = arith.select %32, %33, %27 : vector<3x6x256xi1>, vector<3x6x256xf32>
    %c1_i32_11 = arith.constant 1 : i32
    %35 = vector.broadcast %c1_i32_11 : i32 to vector<3x6x256xi32>
    %36 = arith.cmpi eq, %2, %35 : vector<3x6x256xi32>
    %c3_i32_12 = arith.constant 3 : i32
    %37 = vector.broadcast %c3_i32_12 : i32 to vector<3x6x256xi32>
    %38 = arith.cmpi eq, %3, %37 : vector<3x6x256xi32>
    %39 = arith.andi %36, %38 : vector<3x6x256xi1>
    %cst_13 = arith.constant 3.000000e+01 : f32
    %40 = vector.broadcast %cst_13 : f32 to vector<3x6x256xf32>
    %41 = arith.select %39, %40, %34 : vector<3x6x256xi1>, vector<3x6x256xf32>
    %c2_i32_14 = arith.constant 2 : i32
    %42 = vector.broadcast %c2_i32_14 : i32 to vector<3x6x256xi32>
    %43 = arith.cmpi eq, %2, %42 : vector<3x6x256xi32>
    %c2_i32_15 = arith.constant 2 : i32
    %44 = vector.broadcast %c2_i32_15 : i32 to vector<3x6x256xi32>
    %45 = arith.cmpi eq, %3, %44 : vector<3x6x256xi32>
    %46 = arith.andi %43, %45 : vector<3x6x256xi1>
    %cst_16 = arith.constant 3.300000e+01 : f32
    %47 = vector.broadcast %cst_16 : f32 to vector<3x6x256xf32>
    %48 = arith.select %46, %47, %41 : vector<3x6x256xi1>, vector<3x6x256xf32>
    %c2_i32_17 = arith.constant 2 : i32
    %49 = vector.broadcast %c2_i32_17 : i32 to vector<3x6x256xi32>
    %50 = arith.cmpi eq, %2, %49 : vector<3x6x256xi32>
    %c3_i32_18 = arith.constant 3 : i32
    %51 = vector.broadcast %c3_i32_18 : i32 to vector<3x6x256xi32>
    %52 = arith.cmpi eq, %3, %51 : vector<3x6x256xi32>
    %53 = arith.andi %50, %52 : vector<3x6x256xi1>
    %cst_19 = arith.constant 2.300000e+01 : f32
    %54 = vector.broadcast %cst_19 : f32 to vector<3x6x256xf32>
    %55 = arith.select %53, %54, %48 : vector<3x6x256xi1>, vector<3x6x256xf32>
    %56 = math.exp %1 : vector<3x6x256xf32>
    %57 = arith.negf %1 : vector<3x6x256xf32>
    %58 = math.exp %57 : vector<3x6x256xf32>
    %cst_20 = arith.constant 1.000000e+00 : f32
    %59 = vector.broadcast %cst_20 : f32 to vector<3x6x256xf32>
    %60 = arith.addf %59, %58 : vector<3x6x256xf32>
    %61 = arith.divf %59, %60 : vector<3x6x256xf32>
    %62 = arith.select %8, %56, %61 : vector<3x6x256xi1>, vector<3x6x256xf32>
    %63 = arith.mulf %62, %55 : vector<3x6x256xf32>
    %c0_21 = arith.constant 0 : index
    %c0_22 = arith.constant 0 : index
    %64 = vector.load %arg1[%c0_21, %c0_22] : memref<6x256xf32, #tpu.memory_space<vmem>>, vector<6x256xf32>
    %65 = vector.shape_cast %64 : vector<6x256xf32> to vector<1x6x256xf32>
    %66 = vector.broadcast %65 : vector<1x6x256xf32> to vector<3x6x256xf32>
    %67 = arith.addf %63, %66 : vector<3x6x256xf32>
    %c0_23 = arith.constant 0 : index
    %c0_24 = arith.constant 0 : index
    %c0_25 = arith.constant 0 : index
    %c0_26 = arith.constant 0 : index
    %68 = vector.load %arg3[%c0_23, %c0_24, %c0_25, %c0_26] : memref<1x3x6x256xf32, #tpu.memory_space<vmem>>, vector<1x3x6x256xf32>
    %69 = vector.shape_cast %68 : vector<1x3x6x256xf32> to vector<3x6x256xf32>
    %70 = vector.shape_cast %67 : vector<3x6x256xf32> to vector<1x3x6x256xf32>
    tpu.vector_store %arg3[%c0_23, %c0_24, %c0_25, %c0_26], %70 {strides = array<i32>} : memref<1x3x6x256xf32, #tpu.memory_space<vmem>>, vector<1x3x6x256xf32>,
    return
  }
  func.func @transform_0(%arg0: i32) -> (i32, i32) {
    %c0_i32 = arith.constant 0 : i32
    %c0_i32_0 = arith.constant 0 : i32
    %c0_i32_1 = arith.constant 0 : i32
    return %c0_i32, %c0_i32_0 : i32, i32
  }
  func.func @transform_1(%arg0: i32) -> (i32, i32, i32, i32) {
    %c0_i32 = arith.constant 0 : i32
    %c0_i32_0 = arith.constant 0 : i32
    %c0_i32_1 = arith.constant 0 : i32
    %c0_i32_2 = arith.constant 0 : i32
    return %arg0, %c0_i32, %c0_i32_0, %c0_i32_1 : i32, i32, i32, i32
  }
  func.func @transform_2(%arg0: i32) -> (i32, i32, i32, i32) {
    %c0_i32 = arith.constant 0 : i32
    %c0_i32_0 = arith.constant 0 : i32
    %c0_i32_1 = arith.constant 0 : i32
    %c0_i32_2 = arith.constant 0 : i32
    return %arg0, %c0_i32, %c0_i32_0, %c0_i32_1 : i32, i32, i32, i32
  }
}

</mosaic_0001>

<llo_original>
// kernel: tpu_custom_call.1
$region0: #{tpu_custom_call.1}
  #allocation0 [shape = 'u32[]', space=smem, size = 0x4, offset = 0x4, fixed_abs, tag = 'smem constant byte address 0x4 - core index']
  #allocation1 [shape = 'u32[144,128]{1,0:T(1,128)}', space=vmem, size = 0x12000, scoped, tag = 'internal scratch']
  %s0 = inlined_call_operand.vmem [shape: f32[6,256], index: 0, kind: input, shape index: {}]
  %s1 = inlined_call_operand.vmem [shape: f32[2,3,6,256], index: 1, kind: input, shape index: {}]
  %s2 = inlined_call_operand.vmem [shape: f32[2,3,6,256], index: 2, kind: output, shape index: {}]
  %s3 = sld [smem:[#allocation0]]
  $region41: #{tpu_custom_call.1} parent=0
    _
  %s5 = ssub.s32 1, %s3
  %s6 = scalar_select 0, %s5, %s3
  loop: start=0, step=1, limit=4
  $region2: #{tpu_custom_call.1} parent=0 // loop_pre_header
    _
  $region3: #{tpu_custom_call.1} parent=0 // loop_header
    %s8 = sphi 0, %s12
    %p9 = scmp.ge.s32.totalorder %s8, 4
    %s16 = sphi 0, %s16
    %s18 = sphi 0, %s16
    %s19 = sphi 0, %s18
    %s33 = sphi 0, %s19
    %s39 = sphi 0, %s41
    %s42 = sphi 0, %s39
    %s43 = sphi 0, %s42
    %s59 = sphi 0, %s43
    %s65 = sphi 0, %s67
    %s68 = sphi 0, %s65
    %s69 = sphi 0, %s68
    %s85 = sphi 0, %s69
  $region4: #{tpu_custom_call.1} parent=0 // loop_header_branch
    %11 = sbr.rel (%p9) target = $region8
  $region5: #{tpu_custom_call.1} parent=0 // loop_body
    %s13 = ssub.s32 %s8, 1
    %s14 = ssub.s32 %s8, 2
    %s15 = sadd.s32 %s8, 1
    %s17 = sadd.s32 %s16, 1
    %p20 = scmp.eq.s32.totalorder %s8, 1
    %p21 = scmp.ne.s32.totalorder %s16, %s18
    %p22 = scmp.eq.s32.totalorder %s8, 0
    %p23 = por %p21, %p22
    %p24 = scmp.ne.s32.totalorder %s16, %s18
    %p25 = scmp.eq.s32.totalorder %s13, 1
    %p26 = por %p24, %p25
    %p27 = scmp.ne.s32.totalorder %s18, %s19
    %p28 = scmp.eq.s32.totalorder %s13, 0
    %p29 = por %p27, %p28
    %p30 = scmp.ne.s32.totalorder %s18, %s19
    %p31 = scmp.eq.s32.totalorder %s14, 1
    %p32 = por %p30, %p31
    %p34 = scmp.ne.s32.totalorder %s19, %s33
    %p35 = scmp.eq.s32.totalorder %s14, 0
    %p36 = por %p34, %p35
    %s37 = ssub.s32 %s8, %s15
    %p38 = scmp.eq.s32.totalorder %s37, 0
    %s40 = sadd.s32 %s39, 1
    %s41 = scalar_select %p38, %s39, %s40
    %p44 = pneg %p38
    %p45 = scmp.eq.s32.totalorder %s8, 1
    %p46 = por %p44, %p45
    %p47 = scmp.ne.s32.totalorder %s39, %s42
    %p48 = scmp.eq.s32.totalorder %s8, 0
    %p49 = por %p47, %p48
    %p50 = scmp.ne.s32.totalorder %s39, %s42
    %p51 = scmp.eq.s32.totalorder %s13, 1
    %p52 = por %p50, %p51
    %p53 = scmp.ne.s32.totalorder %s42, %s43
    %p54 = scmp.eq.s32.totalorder %s13, 0
    %p55 = por %p53, %p54
    %p56 = scmp.ne.s32.totalorder %s42, %s43
    %p57 = scmp.eq.s32.totalorder %s14, 1
    %p58 = por %p56, %p57
    %p60 = scmp.ne.s32.totalorder %s43, %s59
    %p61 = scmp.eq.s32.totalorder %s14, 0
    %p62 = por %p60, %p61
    %s63 = ssub.s32 %s8, %s15
    %p64 = scmp.eq.s32.totalorder %s63, 0
    %s66 = sadd.s32 %s65, 1
    %s67 = scalar_select %p64, %s65, %s66
    %p70 = pneg %p64
    %p71 = scmp.eq.s32.totalorder %s8, 1
    %p72 = por %p70, %p71
    %p73 = scmp.ne.s32.totalorder %s65, %s68
    %p74 = scmp.eq.s32.totalorder %s8, 0
    %p75 = por %p73, %p74
    %p76 = scmp.ne.s32.totalorder %s65, %s68
    %p77 = scmp.eq.s32.totalorder %s13, 1
    %p78 = por %p76, %p77
    %p79 = scmp.ne.s32.totalorder %s68, %s69
    %p80 = scmp.eq.s32.totalorder %s13, 0
    %p81 = por %p79, %p80
    %p82 = scmp.ne.s32.totalorder %s68, %s69
    %p83 = scmp.eq.s32.totalorder %s14, 1
    %p84 = por %p82, %p83
    %p86 = scmp.ne.s32.totalorder %s69, %s85
    %p87 = scmp.eq.s32.totalorder %s14, 0
    %p88 = por %p86, %p87
    %p89 = scmp.le.s32.totalorder 1, %s8
    %p90 = scmp.lt.s32.totalorder %s8, 3
    %p91 = pnand %p89, %p90
    %p92 = pneg %p91
    // Predicated region
    $region9: #{tpu_custom_call.1} parent=5 // pred_check
      _
    $region10: #{tpu_custom_call.1} parent=5 // pred_check_branch
      %94 = sbr.rel (%p91) target = $region12
    $region11: #{tpu_custom_call.1} parent=5 // pred_region
      %s95 = ssub.s32 %s8, 1
      // Predicated region
      $region13: #{tpu_custom_call.1} parent=11 // pred_check
        %p96 = pneg %p29
      $region14: #{tpu_custom_call.1} parent=11 // pred_check_branch
        %98 = sbr.rel (%p96) target = $region16
      $region15: #{tpu_custom_call.1} parent=11 // pred_region
        _
      $region16: #{tpu_custom_call.1} parent=11 // pred_fallthru
        _
    $region12: #{tpu_custom_call.1} parent=5 // pred_fallthru
      _
    %p99 = scmp.lt.s32.totalorder %s8, 2
    // Predicated region
    $region17: #{tpu_custom_call.1} parent=5 // pred_check
      %p100 = pneg %p99
    $region18: #{tpu_custom_call.1} parent=5 // pred_check_branch
      %102 = sbr.rel (%p100) target = $region20
    $region19: #{tpu_custom_call.1} parent=5 // pred_region
      // Predicated region
      $region21: #{tpu_custom_call.1} parent=19 // pred_check
        %p103 = pneg %p49
      $region22: #{tpu_custom_call.1} parent=19 // pred_check_branch
        %105 = sbr.rel (%p103) target = $region24
      $region23: #{tpu_custom_call.1} parent=19 // pred_region
        %p106 = scmp.lt.s32.totalorder %s8, 1
        %s107 = scalar_select %p106, %s8, 1
        %s108 = smul.addr %s107, 6
        %s109 = smul.addr %s108, 8
        %s110 = scalar_lea.vmem %s1, %s109
      $region24: #{tpu_custom_call.1} parent=19 // pred_fallthru
        _
    $region20: #{tpu_custom_call.1} parent=5 // pred_fallthru
      _
    %p111 = scmp.le.s32.totalorder 1, %s8
    %p112 = scmp.lt.s32.totalorder %s8, 3
    %p113 = pnand %p111, %p112
    %p114 = pneg %p113
    // Predicated region
    $region25: #{tpu_custom_call.1} parent=5 // pred_check
      _
    $region26: #{tpu_custom_call.1} parent=5 // pred_check_branch
      %116 = sbr.rel (%p113) target = $region28
    $region27: #{tpu_custom_call.1} parent=5 // pred_region
      %s117 = ssub.s32 %s8, 1
      %p118 = pneg %p29
      %p119 = pneg %p26
      %p120 = scmp.lt.s32.totalorder %s13, 1
      %s121 = scalar_select %p120, %s13, 1
      %s122 = smul.addr %s121, 6
      %s123 = smul.addr %s122, 8
      %s124 = scalar_lea.vmem %s1, %s123
      %p125 = pneg %p55
      %p126 = pneg %p52
      %p127 = pneg %p81
      %p128 = pneg %p78
      %p129 = scmp.lt.s32.totalorder %s13, 1
      %s130 = scalar_select %p129, %s13, 1
      %s131 = smul.addr %s130, 6
      %s132 = smul.addr %s131, 8
      %s133 = scalar_lea.vmem %s2, %s132
      %p134 = scmp.lt.s32.totalorder %s13, 1
      %s135 = scalar_select %p134, %s13, 1
      %s136 = smul.addr %s135, 6
      %s137 = smul.addr %s136, 8
      %s138 = scalar_lea.vmem %s1, %s137
      %p139 = scmp.lt.s32.totalorder %s13, 1
      %s140 = scalar_select %p139, %s13, 1
      %s141 = smul.addr %s140, 6
      %s142 = smul.addr %s141, 8
      %s143 = scalar_lea.vmem %s2, %s142
      %v144 = vld [vmem:[%s138] sm:$0x3f]
      %v145 = vld [vmem:[%s138 + $0x8] sm:$0x3f]
      %v146 = vld [vmem:[%s138 + $0x10] sm:$0x3f]
      %v147 = vld [vmem:[%s138 + $0x18] sm:$0x3f]
      %v148 = vld [vmem:[%s138 + $0x20] sm:$0x3f]
      %v149 = vld [vmem:[%s138 + $0x28] sm:$0x3f]
      %v150 = vlaneseq
      %v151 = vshrl.u32 %v150, 7
      %vm152 = vcmp.ge.s32.totalorder %v151, 2
      %vm153 = vcmp.lt.s32.totalorder %v151, 4
      %vm154 = vmand %vm152, %vm153
      %vm155 = vcmp.lt.s32.totalorder %v151, 2
      %v156 = vsel %vm155, 8.0, 1.0
      %vm157 = vcmp.eq.s32.totalorder %v151, 2
      %vm158 = vmand 1, %vm157
      %vm159 = vmand 0, %vm157
      %v160 = vsel %vm158, 10.0, %v156
      %v161 = vsel %vm159, 10.0, %v156
      %vm162 = vcmp.eq.s32.totalorder %v151, 3
      %vm163 = vmand 1, %vm162
      %vm164 = vmand 0, %vm162
      %v165 = vsel %vm163, 13.0, %v160
      %v166 = vsel %vm164, 13.0, %v161
      %v167 = vsel %vm159, 16.0, %v165
      %v168 = vsel %vm158, 16.0, %v166
      %v169 = vsel %vm159, 16.0, %v166
      %v170 = vsel %vm164, 30.0, %v167
      %v171 = vsel %vm163, 30.0, %v168
      %v172 = vsel %vm164, 30.0, %v169
      %v173 = vsel %vm159, 33.0, %v170
      %v174 = vsel %vm159, 33.0, %v171
      %v175 = vsel %vm158, 33.0, %v172
      %v176 = vsel %vm164, 23.0, %v173
      %v177 = vsel %vm164, 23.0, %v174
      %v178 = vsel %vm163, 23.0, %v175
      %v179 = vmul.f32 %v144, 1.442695
      %v180 = vpow.pop %v179
      %v181 = vmul.f32 %v145, 1.442695
      %v182 = vpow.pop %v181
      %v183 = vmul.f32 %v146, 1.442695
      %v184 = vpow.pop %v183
      %v185 = vmul.f32 %v147, 1.442695
      %v186 = vpow.pop %v185
      %v187 = vmul.f32 %v148, 1.442695
      %v188 = vpow.pop %v187
      %v189 = vmul.f32 %v149, 1.442695
      %v190 = vpow.pop %v189
      %v191 = vxor.u32 %v144, 2147483648
      %v192 = vxor.u32 %v145, 2147483648
      %v193 = vxor.u32 %v146, 2147483648
      %v194 = vxor.u32 %v147, 2147483648
      %v195 = vxor.u32 %v148, 2147483648
      %v196 = vxor.u32 %v149, 2147483648
      %v197 = vmul.f32 %v191, 1.442695
      %v198 = vpow.pop %v197
      %v199 = vmul.f32 %v192, 1.442695
      %v200 = vpow.pop %v199
      %v201 = vmul.f32 %v193, 1.442695
      %v202 = vpow.pop %v201
      %v203 = vmul.f32 %v194, 1.442695
      %v204 = vpow.pop %v203
      %v205 = vmul.f32 %v195, 1.442695
      %v206 = vpow.pop %v205
      %v207 = vmul.f32 %v196, 1.442695
      %v208 = vpow.pop %v207
      %v209 = vadd.f32 %v198, 1.0
      %v210 = vadd.f32 %v200, 1.0
      %v211 = vadd.f32 %v202, 1.0
      %v212 = vadd.f32 %v204, 1.0
      %v213 = vadd.f32 %v206, 1.0
      %v214 = vadd.f32 %v208, 1.0
      %v215 = vrcp.pop %v209
      %v216 = vmul.f32 1.0, %v215
      %v217 = vrcp.pop %v210
      %v218 = vmul.f32 1.0, %v217
      %v219 = vrcp.pop %v211
      %v220 = vmul.f32 1.0, %v219
      %v221 = vrcp.pop %v212
      %v222 = vmul.f32 1.0, %v221
      %v223 = vrcp.pop %v213
      %v224 = vmul.f32 1.0, %v223
      %v225 = vrcp.pop %v214
      %v226 = vmul.f32 1.0, %v225
      %v227 = vsel %vm154, %v180, %v216
      %v228 = vsel %vm154, %v182, %v218
      %v229 = vsel %vm154, %v184, %v220
      %v230 = vsel %vm154, %v186, %v222
      %v231 = vsel %vm154, %v188, %v224
      %v232 = vsel %vm154, %v190, %v226
      %v233 = vmul.f32 %v227, %v176
      %v234 = vmul.f32 %v228, %v176
      %v235 = vmul.f32 %v229, %v177
      %v236 = vmul.f32 %v230, %v177
      %v237 = vmul.f32 %v231, %v178
      %v238 = vmul.f32 %v232, %v178
      %v239 = vld [vmem:[%s0] sm:$0x3f]
      %v240 = vld [vmem:[%s0 + $0x8] sm:$0x3f]
      %v241 = vadd.f32 %v233, %v239
      %v242 = vadd.f32 %v234, %v240
      %v243 = vadd.f32 %v235, %v239
      %v244 = vadd.f32 %v236, %v240
      %v245 = vadd.f32 %v237, %v239
      %v246 = vadd.f32 %v238, %v240
      %247 = vst [vmem:[%s143] sm:$0x3f] %v241
      %248 = vst [vmem:[%s143 + $0x8] sm:$0x3f] %v242
      %249 = vst [vmem:[%s143 + $0x10] sm:$0x3f] %v243
      %250 = vst [vmem:[%s143 + $0x18] sm:$0x3f] %v244
      %251 = vst [vmem:[%s143 + $0x20] sm:$0x3f] %v245
      %252 = vst [vmem:[%s143 + $0x28] sm:$0x3f] %v246
      %p253 = scmp.lt.s32.totalorder %s13, 1
      %s254 = scalar_select %p253, %s13, 1
      %s255 = smul.addr %s254, 6
      %s256 = smul.addr %s255, 8
      %s257 = scalar_lea.vmem %s2, %s256
      // Predicated region
      $region29: #{tpu_custom_call.1} parent=27 // pred_check
        %p258 = pneg %p78
      $region30: #{tpu_custom_call.1} parent=27 // pred_check_branch
        %260 = sbr.rel (%p258) target = $region32
      $region31: #{tpu_custom_call.1} parent=27 // pred_region
        _
      $region32: #{tpu_custom_call.1} parent=27 // pred_fallthru
        _
    $region28: #{tpu_custom_call.1} parent=5 // pred_fallthru
      _
    %p261 = scmp.le.s32.totalorder 2, %s8
    // Predicated region
    $region33: #{tpu_custom_call.1} parent=5 // pred_check
      %p262 = pneg %p261
    $region34: #{tpu_custom_call.1} parent=5 // pred_check_branch
      %264 = sbr.rel (%p262) target = $region36
    $region35: #{tpu_custom_call.1} parent=5 // pred_region
      %s265 = ssub.s32 %s8, 2
      // Predicated region
      $region37: #{tpu_custom_call.1} parent=35 // pred_check
        %p266 = pneg %p84
      $region38: #{tpu_custom_call.1} parent=35 // pred_check_branch
        %268 = sbr.rel (%p266) target = $region40
      $region39: #{tpu_custom_call.1} parent=35 // pred_region
        %p269 = scmp.lt.s32.totalorder %s14, 1
        %s270 = scalar_select %p269, %s14, 1
        %s271 = smul.addr %s270, 6
        %s272 = smul.addr %s271, 8
        %s273 = scalar_lea.vmem %s2, %s272
      $region40: #{tpu_custom_call.1} parent=35 // pred_fallthru
        _
    $region36: #{tpu_custom_call.1} parent=5 // pred_fallthru
      _
  $region6: #{tpu_custom_call.1} parent=0 // loop_footer
    %s12 = sadd.s32 1, %s8
  $region7: #{tpu_custom_call.1} parent=0 // loop_footer_branch
    %7 = sbr.rel target = $region3
  $region8: #{tpu_custom_call.1} parent=0 // loop_exit
    _

</llo_original>
